<compile_context>
chip_gen: v7x
topology: tpu7x:2x2x1
jax: 0.10.0
libtpu: 0.0.40
codegen_flags: <defaults>
</compile_context>

<pallas_src>
import jax
import jax.numpy as jnp
from jax.experimental import pallas as pl
from jax.experimental.pallas import tpu as pltpu


def _round_up(x, m):
    return ((x + m - 1) // m) * m


def _spec_embed_kernel(spec_ref, w_ref, b_ref, out_ref):
    # MXU matmul on narrow inputs, f32 accumulation, f32 bias add, downcast on store.
    acc = jnp.dot(spec_ref[...], w_ref[...], preferred_element_type=jnp.float32)
    out_ref[...] = (acc + b_ref[...]).astype(out_ref.dtype)


def spec_embedding(spec, weight, bias, *, tile_b=None, tile_d=None,
                   compute_dtype=jnp.bfloat16):
    """Linear(num_control_features -> d_model).

    spec:   [B, C]
    weight: [C, D]  (pre-transposed torch weight)
    bias:   [D]
    returns [B, D] in spec.dtype
    """
    B, C = spec.shape
    C2, D = weight.shape
    assert C == C2, (C, C2)
    out_dtype = spec.dtype

    # ---- tile selection --------------------------------------------------
    # Lane-dense output: pad D to a multiple of 128 so stores are unmasked.
    D_pad = _round_up(D, 128)
    if tile_d is None:
        if D_pad <= 512:
            tile_d = D_pad
        else:
            tile_d = next(c for c in (512, 384, 256, 128) if D_pad % c == 0)
    assert tile_d % 128 == 0 and D_pad % tile_d == 0

    # Fixed batch tile: multiple of 16 (bf16 sublane packing), capped at 512 so
    # large batches get a multi-step, double-buffered, core-shardable grid.
    if tile_b is None:
        tile_b = min(512, _round_up(B, 16))
    tile_b = _round_up(tile_b, 16)
    B_pad = _round_up(B, tile_b)

    # ---- pad / cast inputs outside the kernel (narrow HBM traffic) --------
    spec_c = spec.astype(compute_dtype)
    w_c = weight.astype(compute_dtype)
    if B_pad != B:
        spec_c = jnp.pad(spec_c, ((0, B_pad - B), (0, 0)))
    if D_pad != D:
        w_c = jnp.pad(w_c, ((0, 0), (0, D_pad - D)))
        bias = jnp.pad(bias, (0, D_pad - D))
    bias2d = bias.reshape(1, D_pad).astype(jnp.float32)

    grid = (B_pad // tile_b, D_pad // tile_d)

    bytes_accessed = (
        spec_c.size * spec_c.dtype.itemsize
        + w_c.size * w_c.dtype.itemsize
        + bias2d.size * 4
        + B_pad * D_pad * jnp.dtype(out_dtype).itemsize
    )

    out = pl.pallas_call(
        _spec_embed_kernel,
        out_shape=jax.ShapeDtypeStruct((B_pad, D_pad), out_dtype),
        grid_spec=pltpu.PrefetchScalarGridSpec(
            num_scalar_prefetch=0,
            grid=grid,
            in_specs=[
                pl.BlockSpec((tile_b, C), lambda i, j: (i, 0)),       # activations
                pl.BlockSpec((C, tile_d), lambda i, j: (0, j)),       # weight slab
                pl.BlockSpec((1, tile_d), lambda i, j: (0, j)),       # bias slab
            ],
            out_specs=pl.BlockSpec((tile_b, tile_d), lambda i, j: (i, j)),
        ),
        compiler_params=pltpu.CompilerParams(
            dimension_semantics=("parallel", "parallel"),
        ),
        cost_estimate=pl.CostEstimate(
            flops=2 * B_pad * C * D_pad,
            transcendentals=0,
            bytes_accessed=bytes_accessed,
        ),
    )(spec_c, w_c, bias2d)

    return out[:B, :D]


def init_params(key, num_control_features, d_model, dtype=jnp.float32):
    """Deterministic init matching torch.nn.Linear's default U(-1/sqrt(fan_in), ...)."""
    kw, kb = jax.random.split(key)
    bound = 1.0 / (num_control_features ** 0.5)
    # torch weight is [d_model, num_control_features]; store transposed [C, D].
    w_t = jax.random.uniform(
        kw, (num_control_features, d_model), dtype=dtype, minval=-bound, maxval=bound
    )
    b = jax.random.uniform(kb, (d_model,), dtype=dtype, minval=-bound, maxval=bound)
    return w_t, b


if __name__ == "__main__":
    key = jax.random.PRNGKey(0)
    k_spec, k_param = jax.random.split(key)

    batch = 8
    num_control_features = 16
    d_model = 32

    spec = jax.random.normal(k_spec, (batch, num_control_features), dtype=jnp.float32)
    w_t, b = init_params(k_param, num_control_features, d_model)

    out = spec_embedding(spec, w_t, b)
    out = jax.block_until_ready(out)
    assert out.shape == (batch, d_model)

    # Reference with the same bf16-input / f32-accumulate math as the kernel.
    ref_bf16 = jnp.dot(
        spec.astype(jnp.bfloat16), w_t.astype(jnp.bfloat16),
        preferred_element_type=jnp.float32,
    ) + b
    assert jnp.allclose(out, ref_bf16, atol=1e-4, rtol=1e-4), "mismatch vs bf16 reference"

    # Sanity check against full-f32 torch-equivalent math (looser tolerance for bf16 inputs).
    ref_f32 = spec @ w_t + b
    assert jnp.allclose(out, ref_f32, atol=3e-2, rtol=3e-2), "mismatch vs f32 reference"

    print("KERNEL_OK")
</pallas_src>

<mosaic_0001>
module attributes {stable_mosaic.version = 11 : i64} {
  func.func @_spec_embed_kernel(%arg0: i32, %arg1: i32, %arg2: memref<16x16xbf16, #tpu.memory_space<vmem>>, %arg3: memref<16x128xbf16, #tpu.memory_space<vmem>>, %arg4: memref<1x128xf32, #tpu.memory_space<vmem>>, %arg5: memref<16x128xf32, #tpu.memory_space<vmem>>) attributes {dimension_semantics = [#tpu.dimension_semantics<parallel>, #tpu.dimension_semantics<parallel>], iteration_bounds = array<i64: 1, 1>, scalar_prefetch = 0 : i64, scratch_operands = 0 : i64, tpu.core_type = #tpu.core_type<tc>, window_params = [{transform_indices = @transform_0, window_bounds = array<i64: 16, 16>}, {transform_indices = @transform_1, window_bounds = array<i64: 16, 128>}, {transform_indices = @transform_2, window_bounds = array<i64: 1, 128>}, {transform_indices = @transform_3, window_bounds = array<i64: 16, 128>}]} {
    %c0 = arith.constant 0 : index
    %c0_0 = arith.constant 0 : index
    %0 = vector.load %arg2[%c0, %c0_0] : memref<16x16xbf16, #tpu.memory_space<vmem>>, vector<16x16xbf16>
    %c0_1 = arith.constant 0 : index
    %c0_2 = arith.constant 0 : index
    %1 = vector.load %arg3[%c0_1, %c0_2] : memref<16x128xbf16, #tpu.memory_space<vmem>>, vector<16x128xbf16>
    %cst = arith.constant dense<0.000000e+00> : vector<16x128xf32>
    %2 = tpu.matmul %0, %1, %cst {dimension_numbers = #tpu.dot_dimension_numbers<[1], [0], [0], [1], [0, 0, 1, 1], [], []>} : vector<16x16xbf16>, vector<16x128xbf16>, vector<16x128xf32> -> vector<16x128xf32>
    %c0_3 = arith.constant 0 : index
    %c0_4 = arith.constant 0 : index
    %3 = vector.load %arg4[%c0_3, %c0_4] : memref<1x128xf32, #tpu.memory_space<vmem>>, vector<1x128xf32>
    %4 = vector.broadcast %3 : vector<1x128xf32> to vector<16x128xf32>
    %5 = arith.addf %2, %4 : vector<16x128xf32>
    %c0_5 = arith.constant 0 : index
    %c0_6 = arith.constant 0 : index
    %6 = vector.load %arg5[%c0_5, %c0_6] : memref<16x128xf32, #tpu.memory_space<vmem>>, vector<16x128xf32>
    tpu.vector_store %arg5[%c0_5, %c0_6], %5 {strides = array<i32>} : memref<16x128xf32, #tpu.memory_space<vmem>>, vector<16x128xf32>,
    return
  }
  func.func @transform_0(%arg0: i32, %arg1: i32) -> (i32, i32) {
    %c0_i32 = arith.constant 0 : i32
    %c0_i32_0 = arith.constant 0 : i32
    return %arg0, %c0_i32 : i32, i32
  }
  func.func @transform_1(%arg0: i32, %arg1: i32) -> (i32, i32) {
    %c0_i32 = arith.constant 0 : i32
    %c0_i32_0 = arith.constant 0 : i32
    return %c0_i32, %arg1 : i32, i32
  }
  func.func @transform_2(%arg0: i32, %arg1: i32) -> (i32, i32) {
    %c0_i32 = arith.constant 0 : i32
    %c0_i32_0 = arith.constant 0 : i32
    return %c0_i32, %arg1 : i32, i32
  }
  func.func @transform_3(%arg0: i32, %arg1: i32) -> (i32, i32) {
    %c0_i32 = arith.constant 0 : i32
    return %arg0, %arg1 : i32, i32
  }
}

</mosaic_0001>

<llo_original>
// kernel: tpu_custom_call.1
$region0: #{tpu_custom_call.1}
  #allocation0 [shape = 'u32[]', space=smem, size = 0x4, offset = 0x4, fixed_abs, tag = 'smem constant byte address 0x4 - core index']
  #allocation1 [shape = 'u32[144,128]{1,0:T(1,128)}', space=vmem, size = 0x12000, scoped, tag = 'internal scratch']
  %s0 = inlined_call_operand.hbm [shape: bf16[16,16], index: 0, kind: input, shape index: {}]
  %s1 = inlined_call_operand.hbm [shape: bf16[16,128], index: 1, kind: input, shape index: {}]
  %s2 = inlined_call_operand.vmem [shape: f32[1,128], index: 2, kind: input, shape index: {}]
  %s3 = inlined_call_operand.hbm [shape: f32[16,128], index: 3, kind: output, shape index: {}]
  %s4 = sld [smem:[#allocation0]]
  $region30: #{tpu_custom_call.1} parent=0
    _
  %s6 = ssub.s32 1, %s4
  %s7 = scalar_select 0, %s6, %s4
  $region1: #{tpu_custom_call.1} parent=0
    #allocation2 [shape = 'u8[4096]{0}', space=vmem, size = 0x1000, scoped, tag = 'input window, operand 0, single buffered']
    #allocation3 [shape = 's32[1]{0}', space=sflag, size = 0x4, scoped, tag = 'scoped memory for tpu_custom_call.1']
    #allocation4 [shape = 's32[1]{0}', space=sflag, size = 0x4, scoped, tag = 'scoped memory for tpu_custom_call.1']
    #allocation5 [shape = 'u8[4096]{0}', space=vmem, size = 0x1000, scoped, tag = 'input window, operand 1, single buffered']
    #allocation6 [shape = 's32[1]{0}', space=sflag, size = 0x4, scoped, tag = 'scoped memory for tpu_custom_call.1']
    #allocation7 [shape = 'u8[8192]{0}', space=vmem, size = 0x2000, scoped, tag = 'output window, operand 0, single buffered']
    %8 = vsyncpa [#allocation3], 0
    %9 = vsyncpa [#allocation6], 0
    %10 = vsyncpa [#allocation4], 0
    // Predicated region
    $region2: #{tpu_custom_call.1} parent=1 // pred_check
      _
    $region3: #{tpu_custom_call.1} parent=1 // pred_check_branch
      %12 = sbr.rel (0) target = $region5
    $region4: #{tpu_custom_call.1} parent=1 // pred_region
      %s14 = ssub.s32 128, 128
      %15 = vsyncadd [#allocation3], %s14
      %s16 = sshll.u32 [#allocation2], 4
      %s17 = int_to_ptr.vmem [resolvable:$true] %s16
      %22 = dma.hbm_to_vmem [thread:$0]  %s0, 128, %s17, [#allocation3], 64, 64, 4
    $region5: #{tpu_custom_call.1} parent=1 // pred_fallthru
      _
    // Predicated region
    $region6: #{tpu_custom_call.1} parent=1 // pred_check
      _
    $region7: #{tpu_custom_call.1} parent=1 // pred_check_branch
      %24 = sbr.rel (0) target = $region9
    $region8: #{tpu_custom_call.1} parent=1 // pred_region
      %s26 = ssub.s32 128, 128
      %27 = vsyncadd [#allocation6], %s26
      %s28 = sshll.u32 [#allocation5], 4
      %s29 = int_to_ptr.vmem [resolvable:$true] %s28
      %34 = dma.hbm_to_vmem [thread:$0]  %s1, 128, %s29, [#allocation6], 64, 64, 4
    $region9: #{tpu_custom_call.1} parent=1 // pred_fallthru
      _
    // Predicated region
    $region10: #{tpu_custom_call.1} parent=1 // pred_check
      _
    $region11: #{tpu_custom_call.1} parent=1 // pred_check_branch
      %36 = sbr.rel (0) target = $region13
    $region12: #{tpu_custom_call.1} parent=1 // pred_region
      _
    $region13: #{tpu_custom_call.1} parent=1 // pred_fallthru
      _
    // Predicated region
    $region14: #{tpu_custom_call.1} parent=1 // pred_check
      _
    $region15: #{tpu_custom_call.1} parent=1 // pred_check_branch
      %38 = sbr.rel (0) target = $region17
    $region16: #{tpu_custom_call.1} parent=1 // pred_region
      %39 = dma.done [#allocation3], 128
    $region17: #{tpu_custom_call.1} parent=1 // pred_fallthru
      _
    // Predicated region
    $region18: #{tpu_custom_call.1} parent=1 // pred_check
      _
    $region19: #{tpu_custom_call.1} parent=1 // pred_check_branch
      %41 = sbr.rel (0) target = $region21
    $region20: #{tpu_custom_call.1} parent=1 // pred_region
      %42 = dma.done [#allocation6], 128
    $region21: #{tpu_custom_call.1} parent=1 // pred_fallthru
      _
    %v44 = vld [vmem:[#allocation2] sm:$0xf]
    %v45 = vld [vmem:[#allocation2 + $0x4] sm:$0xf]
    %v46 = vld [vmem:[#allocation5] sm:$0xf]
    %v47 = vld [vmem:[#allocation5 + $0x4] sm:$0xf]
    %v48 = vld [vmem:[%s2] sm:$0x1]
    %v50 = vlaneseq
    %v51 = vshrl.u32 %v50, 7
    %v52 = vsub.s32 0, %v51
    %v53 = vrot.slane %v48, %v52
    %v57 = vunpack.c.l.b16 %v44
    %v58 = vunpack.c.l.b16 %v45
    %v59 = vpack.c.b16 %v58, %v57
    %v62 = vunpack.c.l.b16 %v46
    %v63 = vunpack.c.l.b16 %v47
    %v64 = vpack.c.b16 %v63, %v62
    %vm66 = vcmask 130048
    %v68 = vsel %vm66, %v59, 0
    %70 = vmatprep.subr.bf16.mxu0 0
    %71 = vmatpush1.bf16.msra.mxu0 %v64
    %72 = vmatprep.subr.bf16.mxu0 0
    %73 = vmatpush1.bf16.msra.mxu0 0
    %74 = vmatprep.subr.bf16.mxu0 0
    %75 = vmatpush1.bf16.msra.mxu0 0
    %76 = vmatprep.subr.bf16.mxu0 0
    %77 = vmatpush1.bf16.msra.mxu0 0
    %78 = vmatprep.subr.bf16.mxu0 0
    %79 = vmatpush1.bf16.msra.mxu0 0
    %80 = vmatprep.subr.bf16.mxu0 0
    %81 = vmatpush1.bf16.msra.mxu0 0
    %82 = vmatprep.subr.bf16.mxu0 0
    %83 = vmatpush1.bf16.msra.mxu0 0
    %84 = vmatprep.subr.bf16.mxu0 0
    %85 = vmatpush1.bf16.msra.mxu0 0
    %86 = vmatprep.subr.bf16.mxu0 0
    %87 = vmatpush1.bf16.msra.mxu0 0
    %88 = vmatprep.subr.bf16.mxu0 0
    %89 = vmatpush1.bf16.msra.mxu0 0
    %90 = vmatprep.subr.bf16.mxu0 0
    %91 = vmatpush1.bf16.msra.mxu0 0
    %92 = vmatprep.subr.bf16.mxu0 0
    %93 = vmatpush1.bf16.msra.mxu0 0
    %94 = vmatprep.subr.bf16.mxu0 0
    %95 = vmatpush1.bf16.msra.mxu0 0
    %96 = vmatprep.subr.bf16.mxu0 0
    %97 = vmatpush1.bf16.msra.mxu0 0
    %98 = vmatprep.subr.bf16.mxu0 0
    %99 = vmatpush1.bf16.msra.mxu0 0
    %100 = vmatprep.subr.bf16.mxu0 0
    %101 = vmatpush1.bf16.msra.mxu0 0
    %102 = vmatprep.mubr.bf16.mxu0 0
    %103 = vmatmul.mubr.bf16.gmra.mrb[0].mxu0 %v68
    %v104 = vpop.f32.mrb[0].mxu0
    %v105 = vadd.f32 %v53, %v104
    %v106 = vpop.f32.mrb[0].mxu0
    %v107 = vpop.f32.mrb[0].mxu0
    %v108 = vadd.f32 %v53, %v107
    %v109 = vpop.f32.mrb[0].mxu0
    %110 = vdwg.mxu0
    %111 = vst [vmem:[#allocation7] sm:$0xff] %v105
    %112 = vst [vmem:[#allocation7 + $0x8] sm:$0xff] %v108
    // Predicated region
    $region22: #{tpu_custom_call.1} parent=1 // pred_check
      _
    $region23: #{tpu_custom_call.1} parent=1 // pred_check_branch
      %114 = sbr.rel (0) target = $region25
    $region24: #{tpu_custom_call.1} parent=1 // pred_region
      %s116 = ssub.s32 256, 256
      %117 = vsyncadd [#allocation4], %s116
      %s118 = sshll.u32 [#allocation7], 4
      %s119 = int_to_ptr.vmem [resolvable:$true] %s118
      %124 = dma.vmem_to_hbm [thread:$0]  %s119, 256, %s3, [#allocation4], 128, 128, 8
    $region25: #{tpu_custom_call.1} parent=1 // pred_fallthru
      _
    // Predicated region
    $region26: #{tpu_custom_call.1} parent=1 // pred_check
      _
    $region27: #{tpu_custom_call.1} parent=1 // pred_check_branch
      %126 = sbr.rel (0) target = $region29
    $region28: #{tpu_custom_call.1} parent=1 // pred_region
      %127 = dma.done [#allocation4], 256
    $region29: #{tpu_custom_call.1} parent=1 // pred_fallthru
      _
    %128 = vsyncpa [#allocation3], 1
    %129 = vsyncpa [#allocation6], 1
    %130 = vsyncpa [#allocation4], 1

</llo_original>
